<compile_context>
chip_gen: v5e
topology: v5e:2x2
jax: 0.10.0
libtpu: 0.0.40
codegen_flags: <defaults>
</compile_context>

<pallas_src>
import functools

import jax
import jax.numpy as jnp
from jax.experimental import pallas as pl
from jax.experimental.pallas import tpu as pltpu


def _conv_bn_silu_kernel(x_ref, w_ref, b_ref, o_ref, patch_ref, *, K, TH, WO, C1):
    # x_ref:     (TH+K-1, Wp, C1) f32  -- input row block with (K-1)-row halo
    # w_ref:     (K*K*C1, TC2)   bf16  -- BN-scale-folded conv weights
    # b_ref:     (1, TC2)        f32   -- folded BN bias
    # o_ref:     (TH*WO, TC2)          -- lane-dense output slab block
    # patch_ref: (TH*WO, K*K*C1) bf16  -- im2col scratch, reused across C2 tiles

    # Build the im2col patch only on the first C2 tile of this (n, row-tile);
    # the scratch persists across the (innermost, sequential) C2 grid axis.
    @pl.when(pl.program_id(2) == 0)
    def _build_patch():
        x = x_ref[...]                                      # (TH+K-1, Wp, C1)
        cols = []
        for kh in range(K):
            for kw in range(K):
                cols.append(x[kh:kh + TH, kw:kw + WO, :].reshape(TH * WO, C1))
        patch_ref[...] = jnp.concatenate(cols, axis=-1).astype(patch_ref.dtype)

    # One MXU matmul with contraction dim K*K*C1 (bf16 x bf16 -> f32 acc).
    acc = jnp.dot(patch_ref[...], w_ref[...], preferred_element_type=jnp.float32)

    # Folded BatchNorm bias + SiLU epilogue, in float32.
    y = acc + b_ref[...]
    y = y * jax.nn.sigmoid(y)
    o_ref[...] = y.astype(o_ref.dtype)


def conv_bn_silu(x_nchw, weight_oihw, gamma, beta, running_mean, running_var,
                 *, k=3, p=1, eps=1e-5, row_tile=None, c2_tile=128):
    """Forward of Conv(c1, c2, k, p, s=1, act='silu', norm='BN') in eval mode."""
    N, C1, H, W = x_nchw.shape
    C2 = weight_oihw.shape[0]
    assert weight_oihw.shape == (C2, C1, k, k)
    out_dtype = x_nchw.dtype

    Hp, Wp = H + 2 * p, W + 2 * p
    assert Hp >= k and Wp >= k
    Ho, Wo = Hp - k + 1, Wp - k + 1                      # stride=1, dilation=1
    KKC1 = k * k * C1

    # ---- fold BN (eval mode) into the conv weights / a per-channel bias -----
    scale = (gamma / jnp.sqrt(running_var + eps)).astype(jnp.float32)   # (C2,)
    bias = (beta - running_mean * scale).astype(jnp.float32)            # (C2,)
    w_hwio = jnp.transpose(weight_oihw, (2, 3, 1, 0)).astype(jnp.float32)
    w_folded = w_hwio * scale[None, None, None, :]                      # (k,k,C1,C2)
    w_mat = w_folded.reshape(KKC1, C2)          # contraction order = (kh, kw, c1)

    # lane-dense output channels: pad C2 up to a multiple of 128
    C2p = -(-C2 // 128) * 128
    TC2 = min(c2_tile, C2p)
    assert TC2 % 128 == 0 and C2p % TC2 == 0
    w_mat = jnp.pad(w_mat, ((0, 0), (0, C2p - C2))).astype(jnp.bfloat16)
    bias2d = jnp.pad(bias, (0, C2p - C2)).reshape(1, C2p)               # f32

    # ---- pick an H row tile (sublane-aligned output slab rows) --------------
    if row_tile is None:
        row_tile = max(8, 2048 // max(Wo, 1))
    TH = max(1, min(Ho, row_tile))
    while (TH * Wo) % 8 != 0:          # keep output block rows a multiple of 8
        TH += 1
    num_h = -(-Ho // TH)               # cdiv
    Ho_pad = num_h * TH

    # ---- input: NCHW -> NHWC, zero pad, add overlapping row windows ---------
    x_nhwc = jnp.transpose(x_nchw, (0, 2, 3, 1)).astype(jnp.float32)
    x_pad = jnp.pad(x_nhwc, ((0, 0), (p, p + (Ho_pad - Ho)), (p, p), (0, 0)))
    # x_pad: (N, Ho_pad + k - 1, Wp, C1); window t needs rows [t*TH, t*TH+TH+k-1)
    x_win = jnp.stack(
        [x_pad[:, t * TH: t * TH + TH + k - 1] for t in range(num_h)], axis=1)
    # x_win: (N, num_h, TH + k - 1, Wp, C1)

    rows = N * num_h * TH * Wo
    num_c2 = C2p // TC2

    kernel = functools.partial(_conv_bn_silu_kernel, K=k, TH=TH, WO=Wo, C1=C1)

    # ---- explicit VMEM budget: double-buffered blocks + im2col scratch ------
    x_blk = (TH + k - 1) * Wp * C1 * 4
    w_blk = KKC1 * TC2 * 2
    b_blk = TC2 * 4
    o_blk = TH * Wo * TC2 * jnp.dtype(out_dtype).itemsize
    patch_blk = TH * Wo * KKC1 * 2
    need = 2 * (x_blk + w_blk + b_blk + o_blk) + patch_blk + (8 << 20)
    vmem_limit = int(min(56 * 2 ** 20, max(32 * 2 ** 20, need)))

    out_slab = pl.pallas_call(
        kernel,
        out_shape=jax.ShapeDtypeStruct((rows, C2p), out_dtype),
        grid_spec=pltpu.PrefetchScalarGridSpec(
            num_scalar_prefetch=0,
            grid=(N, num_h, num_c2),
            in_specs=[
                pl.BlockSpec((None, None, TH + k - 1, Wp, C1),
                             lambda n, t, c: (n, t, 0, 0, 0)),
                pl.BlockSpec((KKC1, TC2), lambda n, t, c: (0, c)),
                pl.BlockSpec((1, TC2), lambda n, t, c: (0, c)),
            ],
            out_specs=pl.BlockSpec((TH * Wo, TC2),
                                   lambda n, t, c, nh=num_h: (n * nh + t, c)),
            scratch_shapes=[pltpu.VMEM((TH * Wo, KKC1), jnp.bfloat16)],
        ),
        compiler_params=pltpu.CompilerParams(
            dimension_semantics=("parallel", "parallel", "arbitrary"),
            vmem_limit_bytes=vmem_limit),
    )(x_win, w_mat, bias2d)

    out = out_slab.reshape(N, num_h * TH, Wo, C2p)[:, :Ho, :, :C2]
    return jnp.transpose(out, (0, 3, 1, 2))                     # NHWC -> NCHW


def _reference(x_nchw, weight_oihw, gamma, beta, mean, var, *, k=3, p=1, eps=1e-5):
    y = jax.lax.conv_general_dilated(
        x_nchw.astype(jnp.float32), weight_oihw.astype(jnp.float32),
        window_strides=(1, 1), padding=[(p, p), (p, p)],
        dimension_numbers=("NCHW", "OIHW", "NCHW"))
    scale = (gamma / jnp.sqrt(var + eps)).reshape(1, -1, 1, 1)
    bias = (beta - mean * gamma / jnp.sqrt(var + eps)).reshape(1, -1, 1, 1)
    y = y * scale + bias
    return y * jax.nn.sigmoid(y)


if __name__ == "__main__":
    key = jax.random.PRNGKey(0)
    k_x, k_w, k_g, k_b, k_m, k_v = jax.random.split(key, 6)

    N, C1, C2, H, W = 2, 4, 8, 16, 16
    K, P = 3, 1

    x = jax.random.normal(k_x, (N, C1, H, W), dtype=jnp.float32)
    weight = 0.1 * jax.random.normal(k_w, (C2, C1, K, K), dtype=jnp.float32)
    gamma = 1.0 + 0.1 * jax.random.normal(k_g, (C2,), dtype=jnp.float32)
    beta = 0.1 * jax.random.normal(k_b, (C2,), dtype=jnp.float32)
    running_mean = 0.1 * jax.random.normal(k_m, (C2,), dtype=jnp.float32)
    running_var = jnp.abs(1.0 + 0.1 * jax.random.normal(k_v, (C2,), dtype=jnp.float32))

    out = conv_bn_silu(x, weight, gamma, beta, running_mean, running_var,
                       k=K, p=P, row_tile=8)
    out = jax.block_until_ready(out)

    ref = _reference(x, weight, gamma, beta, running_mean, running_var, k=K, p=P)
    assert out.shape == (N, C2, H, W)
    max_err = float(jnp.max(jnp.abs(out - ref)))
    assert jnp.allclose(out, ref, atol=2e-2, rtol=2e-2), f"mismatch, max_abs_err={max_err}"

    print("KERNEL_OK")
</pallas_src>

<mosaic_0001>
module attributes {stable_mosaic.version = 11 : i64} {
  func.func @_conv_bn_silu_kernel(%arg0: i32, %arg1: i32, %arg2: i32, %arg3: memref<1x1x10x18x4xf32, #tpu.memory_space<vmem>>, %arg4: memref<36x128xbf16, #tpu.memory_space<vmem>>, %arg5: memref<1x128xf32, #tpu.memory_space<vmem>>, %arg6: memref<128x128xf32, #tpu.memory_space<vmem>>, %arg7: memref<128x36xbf16, #tpu.memory_space<vmem>>) attributes {dimension_semantics = [#tpu.dimension_semantics<parallel>, #tpu.dimension_semantics<parallel>, #tpu.dimension_semantics<arbitrary>], iteration_bounds = array<i64: 2, 2, 1>, scalar_prefetch = 0 : i64, scratch_operands = 1 : i64, tpu.core_type = #tpu.core_type<tc>, window_params = [{transform_indices = @transform_0, window_bounds = array<i64: 1, 1, 10, 18, 4>}, {transform_indices = @transform_1, window_bounds = array<i64: 36, 128>}, {transform_indices = @transform_2, window_bounds = array<i64: 1, 128>}, {transform_indices = @transform_3, window_bounds = array<i64: 128, 128>}]} {
    %c0_i32 = arith.constant 0 : i32
    %0 = arith.cmpi eq, %arg2, %c0_i32 : i32
    %1 = arith.extui %0 : i1 to i32
    %c0_i32_0 = arith.constant 0 : i32
    %2 = arith.cmpi ne, %1, %c0_i32_0 : i32
    scf.if %2 {
      %c0_9 = arith.constant 0 : index
      %c0_10 = arith.constant 0 : index
      %c0_11 = arith.constant 0 : index
      %c0_12 = arith.constant 0 : index
      %c0_13 = arith.constant 0 : index
      %16 = vector.load %arg3[%c0_9, %c0_10, %c0_11, %c0_12, %c0_13] : memref<1x1x10x18x4xf32, #tpu.memory_space<vmem>>, vector<1x1x10x18x4xf32>
      %17 = vector.shape_cast %16 : vector<1x1x10x18x4xf32> to vector<10x18x4xf32>
      %18 = vector.extract_strided_slice %17 {offsets = [0, 0, 0], sizes = [8, 16, 4], strides = [1, 1, 1]} : vector<10x18x4xf32> to vector<8x16x4xf32>
      %19 = vector.shape_cast %18 : vector<8x16x4xf32> to vector<128x4xf32>
      %20 = vector.extract_strided_slice %17 {offsets = [0, 1, 0], sizes = [8, 16, 4], strides = [1, 1, 1]} : vector<10x18x4xf32> to vector<8x16x4xf32>
      %21 = vector.shape_cast %20 : vector<8x16x4xf32> to vector<128x4xf32>
      %22 = vector.extract_strided_slice %17 {offsets = [0, 2, 0], sizes = [8, 16, 4], strides = [1, 1, 1]} : vector<10x18x4xf32> to vector<8x16x4xf32>
      %23 = vector.shape_cast %22 : vector<8x16x4xf32> to vector<128x4xf32>
      %24 = vector.extract_strided_slice %17 {offsets = [1, 0, 0], sizes = [8, 16, 4], strides = [1, 1, 1]} : vector<10x18x4xf32> to vector<8x16x4xf32>
      %25 = vector.shape_cast %24 : vector<8x16x4xf32> to vector<128x4xf32>
      %26 = vector.extract_strided_slice %17 {offsets = [1, 1, 0], sizes = [8, 16, 4], strides = [1, 1, 1]} : vector<10x18x4xf32> to vector<8x16x4xf32>
      %27 = vector.shape_cast %26 : vector<8x16x4xf32> to vector<128x4xf32>
      %28 = vector.extract_strided_slice %17 {offsets = [1, 2, 0], sizes = [8, 16, 4], strides = [1, 1, 1]} : vector<10x18x4xf32> to vector<8x16x4xf32>
      %29 = vector.shape_cast %28 : vector<8x16x4xf32> to vector<128x4xf32>
      %30 = vector.extract_strided_slice %17 {offsets = [2, 0, 0], sizes = [8, 16, 4], strides = [1, 1, 1]} : vector<10x18x4xf32> to vector<8x16x4xf32>
      %31 = vector.shape_cast %30 : vector<8x16x4xf32> to vector<128x4xf32>
      %32 = vector.extract_strided_slice %17 {offsets = [2, 1, 0], sizes = [8, 16, 4], strides = [1, 1, 1]} : vector<10x18x4xf32> to vector<8x16x4xf32>
      %33 = vector.shape_cast %32 : vector<8x16x4xf32> to vector<128x4xf32>
      %34 = vector.extract_strided_slice %17 {offsets = [2, 2, 0], sizes = [8, 16, 4], strides = [1, 1, 1]} : vector<10x18x4xf32> to vector<8x16x4xf32>
      %35 = vector.shape_cast %34 : vector<8x16x4xf32> to vector<128x4xf32>
      %36 = tpu.concatenate %19, %21, %23, %25, %27, %29, %31, %33, %35 in 1 : vector<128x4xf32>, vector<128x4xf32>, vector<128x4xf32>, vector<128x4xf32>, vector<128x4xf32>, vector<128x4xf32>, vector<128x4xf32>, vector<128x4xf32>, vector<128x4xf32> -> vector<128x36xf32>
      %37 = arith.truncf %36 : vector<128x36xf32> to vector<128x36xbf16>
      %c0_14 = arith.constant 0 : index
      %c0_15 = arith.constant 0 : index
      %38 = vector.load %arg7[%c0_14, %c0_15] : memref<128x36xbf16, #tpu.memory_space<vmem>>, vector<128x36xbf16>
      tpu.vector_store %arg7[%c0_14, %c0_15], %37 {strides = array<i32>} : memref<128x36xbf16, #tpu.memory_space<vmem>>, vector<128x36xbf16>,
    } else {
    }
    %c0 = arith.constant 0 : index
    %c0_1 = arith.constant 0 : index
    %3 = vector.load %arg7[%c0, %c0_1] : memref<128x36xbf16, #tpu.memory_space<vmem>>, vector<128x36xbf16>
    %c0_2 = arith.constant 0 : index
    %c0_3 = arith.constant 0 : index
    %4 = vector.load %arg4[%c0_2, %c0_3] : memref<36x128xbf16, #tpu.memory_space<vmem>>, vector<36x128xbf16>
    %cst = arith.constant dense<0.000000e+00> : vector<128x128xf32>
    %5 = tpu.matmul %3, %4, %cst {dimension_numbers = #tpu.dot_dimension_numbers<[1], [0], [0], [1], [0, 0, 1, 1], [], []>} : vector<128x36xbf16>, vector<36x128xbf16>, vector<128x128xf32> -> vector<128x128xf32>
    %c0_4 = arith.constant 0 : index
    %c0_5 = arith.constant 0 : index
    %6 = vector.load %arg5[%c0_4, %c0_5] : memref<1x128xf32, #tpu.memory_space<vmem>>, vector<1x128xf32>
    %7 = vector.broadcast %6 : vector<1x128xf32> to vector<128x128xf32>
    %8 = arith.addf %5, %7 : vector<128x128xf32>
    %9 = arith.negf %8 : vector<128x128xf32>
    %10 = math.exp %9 : vector<128x128xf32>
    %cst_6 = arith.constant 1.000000e+00 : f32
    %11 = vector.broadcast %cst_6 : f32 to vector<128x128xf32>
    %12 = arith.addf %11, %10 : vector<128x128xf32>
    %13 = arith.divf %11, %12 : vector<128x128xf32>
    %14 = arith.mulf %8, %13 : vector<128x128xf32>
    %c0_7 = arith.constant 0 : index
    %c0_8 = arith.constant 0 : index
    %15 = vector.load %arg6[%c0_7, %c0_8] : memref<128x128xf32, #tpu.memory_space<vmem>>, vector<128x128xf32>
    tpu.vector_store %arg6[%c0_7, %c0_8], %14 {strides = array<i32>} : memref<128x128xf32, #tpu.memory_space<vmem>>, vector<128x128xf32>,
    return
  }
  func.func @transform_0(%arg0: i32, %arg1: i32, %arg2: i32) -> (i32, i32, i32, i32, i32) {
    %c0_i32 = arith.constant 0 : i32
    %c0_i32_0 = arith.constant 0 : i32
    %c0_i32_1 = arith.constant 0 : i32
    %c0_i32_2 = arith.constant 0 : i32
    return %arg0, %arg1, %c0_i32, %c0_i32_0, %c0_i32_1 : i32, i32, i32, i32, i32
  }
  func.func @transform_1(%arg0: i32, %arg1: i32, %arg2: i32) -> (i32, i32) {
    %c0_i32 = arith.constant 0 : i32
    %c0_i32_0 = arith.constant 0 : i32
    return %c0_i32, %arg2 : i32, i32
  }
  func.func @transform_2(%arg0: i32, %arg1: i32, %arg2: i32) -> (i32, i32) {
    %c0_i32 = arith.constant 0 : i32
    %c0_i32_0 = arith.constant 0 : i32
    return %c0_i32, %arg2 : i32, i32
  }
  func.func @transform_3(%arg0: i32, %arg1: i32, %arg2: i32) -> (i32, i32) {
    %c2_i32 = arith.constant 2 : i32
    %0 = arith.muli %arg0, %c2_i32 : i32
    %1 = arith.addi %0, %arg1 : i32
    %c0_i32 = arith.constant 0 : i32
    return %1, %arg2 : i32, i32
  }
}

</mosaic_0001>

<llo_original>
// kernel: tpu_custom_call.1
$region0: #{tpu_custom_call.1}
  #allocation0 [shape = 'u32[]', space=smem, size = 0x4, offset = 0x4, fixed_abs, tag = 'smem constant byte address 0x4 - core index']
  #allocation1 [shape = 'u32[72,128]{1,0:T(1,128)}', space=vmem, size = 0x9000, scoped, tag = 'internal scratch']
  #allocation2 [shape = 'bf16[128,36]{1,0:T(8,128)(2,1)}', space=vmem, size = 0x8000, scoped, tag = 'scratch operand']
  %s0 = inlined_call_operand.vmem [shape: f32[2,2,10,18,4], index: 0, kind: input, shape index: {}]
  %s1 = inlined_call_operand.vmem [shape: bf16[36,128], index: 1, kind: input, shape index: {}]
  %s2 = inlined_call_operand.vmem [shape: f32[1,128], index: 2, kind: input, shape index: {}]
  %s3 = inlined_call_operand.hbm [shape: f32[512,128], index: 3, kind: output, shape index: {}]
  %s4 = sld [smem:[#allocation0]]
  $region49: #{tpu_custom_call.1} parent=0
    _
  %s6 = ssub.s32 1, %s4
  %s7 = scalar_select 0, %s6, %s4
  $region1: #{tpu_custom_call.1} parent=0
    #allocation3 [shape = 'u8[131072]{0}', space=vmem, size = 0x20000, scoped, tag = 'output window, operand 0']
    #allocation4 [shape = 's32[2]{0}', space=sflag, size = 0x8, scoped, tag = 'scoped memory for tpu_custom_call.1']
    %8 = vsyncpa [#allocation4], 0
    %s9 = scalar_lea.sflag [#allocation4], 1
    %10 = vsyncpa %s9, 0
    loop: start=0, step=1, limit=6
    $region2: #{tpu_custom_call.1} parent=1 // loop_pre_header
      _
    $region3: #{tpu_custom_call.1} parent=1 // loop_header
      %s12 = sphi 0, %s16
      %p13 = scmp.ge.s32.totalorder %s12, 6
      %s19 = sphi 0, %s38
      %s20 = sphi 0, %s34
      %s21 = sphi 0, %s30
      %s22 = sphi 0, %s19
      %s23 = sphi 0, %s20
      %s24 = sphi 0, %s21
      %s25 = sphi 0, %s22
      %s26 = sphi 0, %s23
      %s27 = sphi 0, %s24
      %s43 = sphi 0, %s45
      %s46 = sphi 0, %s43
      %s47 = sphi 0, %s46
      %s63 = sphi 0, %s47
      %s69 = sphi 0, %s71
      %s72 = sphi 0, %s69
      %s73 = sphi 0, %s72
      %s89 = sphi 0, %s73
      %s95 = sphi 0, %s97
      %s98 = sphi 0, %s95
      %s99 = sphi 0, %s98
      %s115 = sphi 0, %s99
      %s127 = sphi 0, %s129
      %s130 = sphi 0, %s127
      %s131 = sphi 0, %s130
      %s147 = sphi 0, %s131
    $region4: #{tpu_custom_call.1} parent=1 // loop_header_branch
      %15 = sbr.rel (%p13) target = $region8
    $region5: #{tpu_custom_call.1} parent=1 // loop_body
      %s17 = ssub.s32 %s12, 1
      %s18 = ssub.s32 %s12, 2
      %s28 = sadd.s32 1, %s21
      %p29 = scmp.ge.s32.totalorder %s28, 1
      %s30 = scalar_select %p29, 0, %s28
      %s31 = sadd.s32 1, %s20
      %s32 = scalar_select %p29, %s31, %s20
      %p33 = scmp.ge.s32.totalorder %s32, 2
      %s34 = scalar_select %p33, 0, %s32
      %s35 = sadd.s32 1, %s19
      %s36 = scalar_select %p33, %s35, %s19
      %p37 = scmp.ge.s32.totalorder %s36, 2
      %s38 = scalar_select %p37, 0, %s36
      %s39 = ssub.s32 %s19, %s38
      %s40 = ssub.s32 %s20, %s34
      %s41 = sor.u32 %s39, %s40
      %p42 = scmp.eq.s32.totalorder %s41, 0
      %s44 = sadd.s32 %s43, 1
      %s45 = scalar_select %p42, %s43, %s44
      %p48 = pneg %p42
      %p49 = scmp.eq.s32.totalorder %s12, 3
      %p50 = por %p48, %p49
      %p51 = scmp.ne.s32.totalorder %s43, %s46
      %p52 = scmp.eq.s32.totalorder %s12, 0
      %p53 = por %p51, %p52
      %p54 = scmp.ne.s32.totalorder %s43, %s46
      %p55 = scmp.eq.s32.totalorder %s17, 3
      %p56 = por %p54, %p55
      %p57 = scmp.ne.s32.totalorder %s46, %s47
      %p58 = scmp.eq.s32.totalorder %s17, 0
      %p59 = por %p57, %p58
      %p60 = scmp.ne.s32.totalorder %s46, %s47
      %p61 = scmp.eq.s32.totalorder %s18, 3
      %p62 = por %p60, %p61
      %p64 = scmp.ne.s32.totalorder %s47, %s63
      %p65 = scmp.eq.s32.totalorder %s18, 0
      %p66 = por %p64, %p65
      %s67 = ssub.s32 %s21, %s30
      %p68 = scmp.eq.s32.totalorder %s67, 0
      %s70 = sadd.s32 %s69, 1
      %s71 = scalar_select %p68, %s69, %s70
      %p74 = pneg %p68
      %p75 = scmp.eq.s32.totalorder %s12, 3
      %p76 = por %p74, %p75
      %p77 = scmp.ne.s32.totalorder %s69, %s72
      %p78 = scmp.eq.s32.totalorder %s12, 0
      %p79 = por %p77, %p78
      %p80 = scmp.ne.s32.totalorder %s69, %s72
      %p81 = scmp.eq.s32.totalorder %s17, 3
      %p82 = por %p80, %p81
      %p83 = scmp.ne.s32.totalorder %s72, %s73
      %p84 = scmp.eq.s32.totalorder %s17, 0
      %p85 = por %p83, %p84
      %p86 = scmp.ne.s32.totalorder %s72, %s73
      %p87 = scmp.eq.s32.totalorder %s18, 3
      %p88 = por %p86, %p87
      %p90 = scmp.ne.s32.totalorder %s73, %s89
      %p91 = scmp.eq.s32.totalorder %s18, 0
      %p92 = por %p90, %p91
      %s93 = ssub.s32 %s21, %s30
      %p94 = scmp.eq.s32.totalorder %s93, 0
      %s96 = sadd.s32 %s95, 1
      %s97 = scalar_select %p94, %s95, %s96
      %p100 = pneg %p94
      %p101 = scmp.eq.s32.totalorder %s12, 3
      %p102 = por %p100, %p101
      %p103 = scmp.ne.s32.totalorder %s95, %s98
      %p104 = scmp.eq.s32.totalorder %s12, 0
      %p105 = por %p103, %p104
      %p106 = scmp.ne.s32.totalorder %s95, %s98
      %p107 = scmp.eq.s32.totalorder %s17, 3
      %p108 = por %p106, %p107
      %p109 = scmp.ne.s32.totalorder %s98, %s99
      %p110 = scmp.eq.s32.totalorder %s17, 0
      %p111 = por %p109, %p110
      %p112 = scmp.ne.s32.totalorder %s98, %s99
      %p113 = scmp.eq.s32.totalorder %s18, 3
      %p114 = por %p112, %p113
      %p116 = scmp.ne.s32.totalorder %s99, %s115
      %p117 = scmp.eq.s32.totalorder %s18, 0
      %p118 = por %p116, %p117
      %s119 = smul.u32 %s19, 2
      %s120 = sadd.s32 %s119, %s20
      %s121 = smul.u32 %s38, 2
      %s122 = sadd.s32 %s121, %s34
      %s123 = ssub.s32 %s120, %s122
      %s124 = ssub.s32 %s21, %s30
      %s125 = sor.u32 %s123, %s124
      %p126 = scmp.eq.s32.totalorder %s125, 0
      %s128 = sadd.s32 %s127, 1
      %s129 = scalar_select %p126, %s127, %s128
      %p132 = pneg %p126
      %p133 = scmp.eq.s32.totalorder %s12, 3
      %p134 = por %p132, %p133
      %p135 = scmp.ne.s32.totalorder %s127, %s130
      %p136 = scmp.eq.s32.totalorder %s12, 0
      %p137 = por %p135, %p136
      %p138 = scmp.ne.s32.totalorder %s127, %s130
      %p139 = scmp.eq.s32.totalorder %s17, 3
      %p140 = por %p138, %p139
      %p141 = scmp.ne.s32.totalorder %s130, %s131
      %p142 = scmp.eq.s32.totalorder %s17, 0
      %p143 = por %p141, %p142
      %p144 = scmp.ne.s32.totalorder %s130, %s131
      %p145 = scmp.eq.s32.totalorder %s18, 3
      %p146 = por %p144, %p145
      %p148 = scmp.ne.s32.totalorder %s131, %s147
      %p149 = scmp.eq.s32.totalorder %s18, 0
      %p150 = por %p148, %p149
      %p151 = scmp.le.s32.totalorder 1, %s12
      %p152 = scmp.lt.s32.totalorder %s12, 5
      %p153 = pnand %p151, %p152
      %p154 = pneg %p153
      // Predicated region
      $region9: #{tpu_custom_call.1} parent=5 // pred_check
        _
      $region10: #{tpu_custom_call.1} parent=5 // pred_check_branch
        %156 = sbr.rel (%p153) target = $region12
      $region11: #{tpu_custom_call.1} parent=5 // pred_region
        %s157 = ssub.s32 %s12, 1
        // Predicated region
        $region13: #{tpu_custom_call.1} parent=11 // pred_check
          %p158 = pneg %p85
        $region14: #{tpu_custom_call.1} parent=11 // pred_check_branch
          %160 = sbr.rel (%p158) target = $region16
        $region15: #{tpu_custom_call.1} parent=11 // pred_region
          %p161 = scmp.lt.s32.totalorder %s24, 0
          %s162 = scalar_select %p161, %s24, 0
          %s163 = smul.addr %s162, 4
          %s164 = scalar_lea.vmem %s1, %s163
        $region16: #{tpu_custom_call.1} parent=11 // pred_fallthru
          _
        // Predicated region
        $region17: #{tpu_custom_call.1} parent=11 // pred_check
          %p165 = pneg %p111
        $region18: #{tpu_custom_call.1} parent=11 // pred_check_branch
          %167 = sbr.rel (%p165) target = $region20
        $region19: #{tpu_custom_call.1} parent=11 // pred_region
          %p168 = scmp.lt.s32.totalorder %s24, 0
          %s169 = scalar_select %p168, %s24, 0
          %s170 = scalar_lea.vmem %s2, %s169
        $region20: #{tpu_custom_call.1} parent=11 // pred_fallthru
          _
      $region12: #{tpu_custom_call.1} parent=5 // pred_fallthru
        _
      %p171 = scmp.lt.s32.totalorder %s12, 4
      // Predicated region
      $region21: #{tpu_custom_call.1} parent=5 // pred_check
        %p172 = pneg %p171
      $region22: #{tpu_custom_call.1} parent=5 // pred_check_branch
        %174 = sbr.rel (%p172) target = $region24
      $region23: #{tpu_custom_call.1} parent=5 // pred_region
        // Predicated region
        $region25: #{tpu_custom_call.1} parent=23 // pred_check
          %p175 = pneg %p53
        $region26: #{tpu_custom_call.1} parent=23 // pred_check_branch
          %177 = sbr.rel (%p175) target = $region28
        $region27: #{tpu_custom_call.1} parent=23 // pred_region
          %p178 = scmp.lt.s32.totalorder %s19, 1
          %s179 = scalar_select %p178, %s19, 1
          %p180 = scmp.lt.s32.totalorder %s20, 1
          %s181 = scalar_select %p180, %s20, 1
          %s182 = smul.addr %s181, 30
          %s183 = smul.addr %s179, 60
          %s184 = sadd.s32 %s182, %s183
          %s185 = smul.addr %s184, 8
          %s186 = scalar_lea.vmem %s0, %s185
        $region28: #{tpu_custom_call.1} parent=23 // pred_fallthru
          _
      $region24: #{tpu_custom_call.1} parent=5 // pred_fallthru
        _
      %p187 = scmp.le.s32.totalorder 1, %s12
      %p188 = scmp.lt.s32.totalorder %s12, 5
      %p189 = pnand %p187, %p188
      %p190 = pneg %p189
      // Predicated region
      $region29: #{tpu_custom_call.1} parent=5 // pred_check
        _
      $region30: #{tpu_custom_call.1} parent=5 // pred_check_branch
        %192 = sbr.rel (%p189) target = $region32
      $region31: #{tpu_custom_call.1} parent=5 // pred_region
        %s193 = ssub.s32 %s12, 1
        %p194 = scmp.lt.s32.totalorder %s22, 1
        %s195 = scalar_select %p194, %s22, 1
        %p196 = scmp.lt.s32.totalorder %s23, 1
        %s197 = scalar_select %p196, %s23, 1
        %s198 = smul.addr %s197, 30
        %s199 = smul.addr %s195, 60
        %s200 = sadd.s32 %s198, %s199
        %s201 = smul.addr %s200, 8
        %s202 = scalar_lea.vmem %s0, %s201
        %p203 = pneg %p59
        %p204 = pneg %p56
        %p205 = scmp.lt.s32.totalorder %s24, 0
        %s206 = scalar_select %p205, %s24, 0
        %s207 = smul.addr %s206, 4
        %s208 = scalar_lea.vmem %s1, %s207
        %p209 = pneg %p85
        %p210 = pneg %p82
        %p211 = scmp.lt.s32.totalorder %s24, 0
        %s212 = scalar_select %p211, %s24, 0
        %s213 = scalar_lea.vmem %s2, %s212
        %p214 = pneg %p111
        %p215 = pneg %p108
        %p216 = pneg %p143
        %p217 = pneg %p140
        %s218 = sand.u32 %s130, 1
        %s219 = scalar_lea.sflag [#allocation4], %s218
        %s220 = sand.u32 %s130, 1
        %s221 = smul.addr %s220, 128
        %s222 = scalar_lea.vmem [#allocation3], %s221
        %p223 = scmp.lt.s32.totalorder %s22, 1
        %s224 = scalar_select %p223, %s22, 1
        %p225 = scmp.lt.s32.totalorder %s23, 1
        %s226 = scalar_select %p225, %s23, 1
        %s227 = smul.addr %s226, 30
        %s228 = smul.addr %s224, 60
        %s229 = sadd.s32 %s227, %s228
        %s230 = smul.addr %s229, 8
        %s231 = scalar_lea.vmem %s0, %s230
        %p232 = scmp.lt.s32.totalorder %s24, 0
        %s233 = scalar_select %p232, %s24, 0
        %s234 = smul.addr %s233, 4
        %s235 = scalar_lea.vmem %s1, %s234
        %p236 = scmp.lt.s32.totalorder %s24, 0
        %s237 = scalar_select %p236, %s24, 0
        %s238 = scalar_lea.vmem %s2, %s237
        %s239 = smul.u32 %s22, 2
        %s240 = sadd.s32 %s239, %s23
        %s241 = smul.u32 16, %s240
        %p243 = scmp.eq.s32.totalorder %s24, 0
        // Predicated region
        $region33: #{tpu_custom_call.1} parent=31 // pred_check
          %p244 = pneg %p243
        $region34: #{tpu_custom_call.1} parent=31 // pred_check_branch
          %246 = sbr.rel (%p244) target = $region36
        $region35: #{tpu_custom_call.1} parent=31 // pred_region
          %v247 = vld [vmem:[%s231] sm:$0xff]
          %v248 = vld [vmem:[%s231 + $0x8] sm:$0xff]
          %v249 = vld [vmem:[%s231 + $0x10] sm:$0x3]
          %v250 = vld [vmem:[%s231 + $0x18] sm:$0xff]
          %v251 = vld [vmem:[%s231 + $0x20] sm:$0xff]
          %v252 = vld [vmem:[%s231 + $0x28] sm:$0x3]
          %v253 = vld [vmem:[%s231 + $0x30] sm:$0xff]
          %v254 = vld [vmem:[%s231 + $0x38] sm:$0xff]
          %v255 = vld [vmem:[%s231 + $0x40] sm:$0x3]
          %v256 = vld [vmem:[%s231 + $0x48] sm:$0xff]
          %v257 = vld [vmem:[%s231 + $0x50] sm:$0xff]
          %v258 = vld [vmem:[%s231 + $0x58] sm:$0x3]
          %v259 = vld [vmem:[%s231 + $0x60] sm:$0xff]
          %v260 = vld [vmem:[%s231 + $0x68] sm:$0xff]
          %v261 = vld [vmem:[%s231 + $0x70] sm:$0x3]
          %v262 = vld [vmem:[%s231 + $0x78] sm:$0xff]
          %v263 = vld [vmem:[%s231 + $0x80] sm:$0xff]
          %v264 = vld [vmem:[%s231 + $0x88] sm:$0x3]
          %v265 = vld [vmem:[%s231 + $0x90] sm:$0xff]
          %v266 = vld [vmem:[%s231 + $0x98] sm:$0xff]
          %v267 = vld [vmem:[%s231 + $0xa0] sm:$0x3]
          %v268 = vld [vmem:[%s231 + $0xa8] sm:$0xff]
          %v269 = vld [vmem:[%s231 + $0xb0] sm:$0xff]
          %v270 = vld [vmem:[%s231 + $0xb8] sm:$0x3]
          %v271 = vld [vmem:[%s231 + $0xc0] sm:$0xff]
          %v272 = vld [vmem:[%s231 + $0xc8] sm:$0xff]
          %v273 = vld [vmem:[%s231 + $0xd0] sm:$0x3]
          %v274 = vld [vmem:[%s231 + $0xd8] sm:$0xff]
          %v275 = vld [vmem:[%s231 + $0xe0] sm:$0xff]
          %v276 = vld [vmem:[%s231 + $0xe8] sm:$0x3]
          %vm301 = vcmask 1046528
          %v302 = vrot.slane %v247, 1
          %v303 = vrot.slane %v248, 1
          %v304 = vsel %vm301, %v302, %v303
          %v305 = vrot.slane %v249, 1
          %v306 = vsel %vm301, %v303, %v305
          %v307 = vrot.slane %v250, 1
          %v308 = vrot.slane %v251, 1
          %v309 = vsel %vm301, %v307, %v308
          %v310 = vrot.slane %v252, 1
          %v311 = vsel %vm301, %v308, %v310
          %v312 = vrot.slane %v253, 1
          %v313 = vrot.slane %v254, 1
          %v314 = vsel %vm301, %v312, %v313
          %v315 = vrot.slane %v255, 1
          %v316 = vsel %vm301, %v313, %v315
          %v317 = vrot.slane %v256, 1
          %v318 = vrot.slane %v257, 1
          %v319 = vsel %vm301, %v317, %v318
          %v320 = vrot.slane %v258, 1
          %v321 = vsel %vm301, %v318, %v320
          %v322 = vrot.slane %v259, 1
          %v323 = vrot.slane %v260, 1
          %v324 = vsel %vm301, %v322, %v323
          %v325 = vrot.slane %v261, 1
          %v326 = vsel %vm301, %v323, %v325
          %v327 = vrot.slane %v262, 1
          %v328 = vrot.slane %v263, 1
          %v329 = vsel %vm301, %v327, %v328
          %v330 = vrot.slane %v264, 1
          %v331 = vsel %vm301, %v328, %v330
          %v332 = vrot.slane %v265, 1
          %v333 = vrot.slane %v266, 1
          %v334 = vsel %vm301, %v332, %v333
          %v335 = vrot.slane %v267, 1
          %v336 = vsel %vm301, %v333, %v335
          %v337 = vrot.slane %v268, 1
          %v338 = vrot.slane %v269, 1
          %v339 = vsel %vm301, %v337, %v338
          %v340 = vrot.slane %v270, 1
          %v341 = vsel %vm301, %v338, %v340
          %vm342 = vcmask 1045504
          %v343 = vrot.slane %v247, 2
          %v344 = vrot.slane %v248, 2
          %v345 = vsel %vm342, %v343, %v344
          %v346 = vrot.slane %v249, 2
          %v347 = vsel %vm342, %v344, %v346
          %v348 = vrot.slane %v250, 2
          %v349 = vrot.slane %v251, 2
          %v350 = vsel %vm342, %v348, %v349
          %v351 = vrot.slane %v252, 2
          %v352 = vsel %vm342, %v349, %v351
          %v353 = vrot.slane %v253, 2
          %v354 = vrot.slane %v254, 2
          %v355 = vsel %vm342, %v353, %v354
          %v356 = vrot.slane %v255, 2
          %v357 = vsel %vm342, %v354, %v356
          %v358 = vrot.slane %v256, 2
          %v359 = vrot.slane %v257, 2
          %v360 = vsel %vm342, %v358, %v359
          %v361 = vrot.slane %v258, 2
          %v362 = vsel %vm342, %v359, %v361
          %v363 = vrot.slane %v259, 2
          %v364 = vrot.slane %v260, 2
          %v365 = vsel %vm342, %v363, %v364
          %v366 = vrot.slane %v261, 2
          %v367 = vsel %vm342, %v364, %v366
          %v368 = vrot.slane %v262, 2
          %v369 = vrot.slane %v263, 2
          %v370 = vsel %vm342, %v368, %v369
          %v371 = vrot.slane %v264, 2
          %v372 = vsel %vm342, %v369, %v371
          %v373 = vrot.slane %v265, 2
          %v374 = vrot.slane %v266, 2
          %v375 = vsel %vm342, %v373, %v374
          %v376 = vrot.slane %v267, 2
          %v377 = vsel %vm342, %v374, %v376
          %v378 = vrot.slane %v268, 2
          %v379 = vrot.slane %v269, 2
          %v380 = vsel %vm342, %v378, %v379
          %v381 = vrot.slane %v270, 2
          %v382 = vsel %vm342, %v379, %v381
          %v386 = vrot.slane %v271, 1
          %v387 = vrot.slane %v272, 1
          %v388 = vsel %vm301, %v386, %v387
          %v389 = vrot.slane %v273, 1
          %v390 = vsel %vm301, %v387, %v389
          %v391 = vrot.slane %v271, 2
          %v392 = vrot.slane %v272, 2
          %v393 = vsel %vm342, %v391, %v392
          %v394 = vrot.slane %v273, 2
          %v395 = vsel %vm342, %v392, %v394
          %v399 = vrot.slane %v274, 1
          %v400 = vrot.slane %v275, 1
          %v401 = vsel %vm301, %v399, %v400
          %v402 = vrot.slane %v276, 1
          %v403 = vsel %vm301, %v400, %v402
          %v404 = vrot.slane %v274, 2
          %v405 = vrot.slane %v275, 2
          %v406 = vsel %vm342, %v404, %v405
          %v407 = vrot.slane %v276, 2
          %v408 = vsel %vm342, %v405, %v407
          %409 = vrot.lane.b32.xlu0 %v304, 4
          %v410 = vpop.permute.xlu0 %409
          %411 = vrot.lane.b32.xlu0 %v306, 4
          %v412 = vpop.permute.xlu0 %411
          %413 = vrot.lane.b32.xlu0 %v309, 4
          %v414 = vpop.permute.xlu0 %413
          %415 = vrot.lane.b32.xlu0 %v311, 4
          %v416 = vpop.permute.xlu0 %415
          %417 = vrot.lane.b32.xlu0 %v314, 4
          %v418 = vpop.permute.xlu0 %417
          %419 = vrot.lane.b32.xlu0 %v316, 4
          %v420 = vpop.permute.xlu0 %419
          %421 = vrot.lane.b32.xlu0 %v319, 4
          %v422 = vpop.permute.xlu0 %421
          %423 = vrot.lane.b32.xlu0 %v321, 4
          %v424 = vpop.permute.xlu0 %423
          %425 = vrot.lane.b32.xlu0 %v324, 4
          %v426 = vpop.permute.xlu0 %425
          %427 = vrot.lane.b32.xlu0 %v326, 4
          %v428 = vpop.permute.xlu0 %427
          %429 = vrot.lane.b32.xlu0 %v329, 4
          %v430 = vpop.permute.xlu0 %429
          %431 = vrot.lane.b32.xlu0 %v331, 4
          %v432 = vpop.permute.xlu0 %431
          %433 = vrot.lane.b32.xlu0 %v334, 4
          %v434 = vpop.permute.xlu0 %433
          %435 = vrot.lane.b32.xlu0 %v336, 4
          %v436 = vpop.permute.xlu0 %435
          %437 = vrot.lane.b32.xlu0 %v339, 4
          %v438 = vpop.permute.xlu0 %437
          %439 = vrot.lane.b32.xlu0 %v341, 4
          %v440 = vpop.permute.xlu0 %439
          %457 = vrot.lane.b32.xlu0 %v345, 8
          %v458 = vpop.permute.xlu0 %457
          %459 = vrot.lane.b32.xlu0 %v347, 8
          %v460 = vpop.permute.xlu0 %459
          %461 = vrot.lane.b32.xlu0 %v350, 8
          %v462 = vpop.permute.xlu0 %461
          %463 = vrot.lane.b32.xlu0 %v352, 8
          %v464 = vpop.permute.xlu0 %463
          %465 = vrot.lane.b32.xlu0 %v355, 8
          %v466 = vpop.permute.xlu0 %465
          %467 = vrot.lane.b32.xlu0 %v357, 8
          %v468 = vpop.permute.xlu0 %467
          %469 = vrot.lane.b32.xlu0 %v360, 8
          %v470 = vpop.permute.xlu0 %469
          %471 = vrot.lane.b32.xlu0 %v362, 8
          %v472 = vpop.permute.xlu0 %471
          %473 = vrot.lane.b32.xlu0 %v365, 8
          %v474 = vpop.permute.xlu0 %473
          %475 = vrot.lane.b32.xlu0 %v367, 8
          %v476 = vpop.permute.xlu0 %475
          %477 = vrot.lane.b32.xlu0 %v370, 8
          %v478 = vpop.permute.xlu0 %477
          %479 = vrot.lane.b32.xlu0 %v372, 8
          %v480 = vpop.permute.xlu0 %479
          %481 = vrot.lane.b32.xlu0 %v375, 8
          %v482 = vpop.permute.xlu0 %481
          %483 = vrot.lane.b32.xlu0 %v377, 8
          %v484 = vpop.permute.xlu0 %483
          %485 = vrot.lane.b32.xlu0 %v380, 8
          %v486 = vpop.permute.xlu0 %485
          %487 = vrot.lane.b32.xlu0 %v382, 8
          %v488 = vpop.permute.xlu0 %487
          %505 = vrot.lane.b32.xlu0 %v250, 12
          %v506 = vpop.permute.xlu0 %505
          %507 = vrot.lane.b32.xlu0 %v251, 12
          %v508 = vpop.permute.xlu0 %507
          %509 = vrot.lane.b32.xlu0 %v253, 12
          %v510 = vpop.permute.xlu0 %509
          %511 = vrot.lane.b32.xlu0 %v254, 12
          %v512 = vpop.permute.xlu0 %511
          %513 = vrot.lane.b32.xlu0 %v256, 12
          %v514 = vpop.permute.xlu0 %513
          %515 = vrot.lane.b32.xlu0 %v257, 12
          %v516 = vpop.permute.xlu0 %515
          %517 = vrot.lane.b32.xlu0 %v259, 12
          %v518 = vpop.permute.xlu0 %517
          %519 = vrot.lane.b32.xlu0 %v260, 12
          %v520 = vpop.permute.xlu0 %519
          %521 = vrot.lane.b32.xlu0 %v262, 12
          %v522 = vpop.permute.xlu0 %521
          %523 = vrot.lane.b32.xlu0 %v263, 12
          %v524 = vpop.permute.xlu0 %523
          %525 = vrot.lane.b32.xlu0 %v265, 12
          %v526 = vpop.permute.xlu0 %525
          %527 = vrot.lane.b32.xlu0 %v266, 12
          %v528 = vpop.permute.xlu0 %527
          %529 = vrot.lane.b32.xlu0 %v268, 12
          %v530 = vpop.permute.xlu0 %529
          %531 = vrot.lane.b32.xlu0 %v269, 12
          %v532 = vpop.permute.xlu0 %531
          %533 = vrot.lane.b32.xlu0 %v271, 12
          %v534 = vpop.permute.xlu0 %533
          %535 = vrot.lane.b32.xlu0 %v272, 12
          %v536 = vpop.permute.xlu0 %535
          %553 = vrot.lane.b32.xlu0 %v309, 16
          %v554 = vpop.permute.xlu0 %553
          %555 = vrot.lane.b32.xlu0 %v311, 16
          %v556 = vpop.permute.xlu0 %555
          %557 = vrot.lane.b32.xlu0 %v314, 16
          %v558 = vpop.permute.xlu0 %557
          %559 = vrot.lane.b32.xlu0 %v316, 16
          %v560 = vpop.permute.xlu0 %559
          %561 = vrot.lane.b32.xlu0 %v319, 16
          %v562 = vpop.permute.xlu0 %561
          %563 = vrot.lane.b32.xlu0 %v321, 16
          %v564 = vpop.permute.xlu0 %563
          %565 = vrot.lane.b32.xlu0 %v324, 16
          %v566 = vpop.permute.xlu0 %565
          %567 = vrot.lane.b32.xlu0 %v326, 16
          %v568 = vpop.permute.xlu0 %567
          %569 = vrot.lane.b32.xlu0 %v329, 16
          %v570 = vpop.permute.xlu0 %569
          %571 = vrot.lane.b32.xlu0 %v331, 16
          %v572 = vpop.permute.xlu0 %571
          %573 = vrot.lane.b32.xlu0 %v334, 16
          %v574 = vpop.permute.xlu0 %573
          %575 = vrot.lane.b32.xlu0 %v336, 16
          %v576 = vpop.permute.xlu0 %575
          %577 = vrot.lane.b32.xlu0 %v339, 16
          %v578 = vpop.permute.xlu0 %577
          %579 = vrot.lane.b32.xlu0 %v341, 16
          %v580 = vpop.permute.xlu0 %579
          %581 = vrot.lane.b32.xlu0 %v388, 16
          %v582 = vpop.permute.xlu0 %581
          %583 = vrot.lane.b32.xlu0 %v390, 16
          %v584 = vpop.permute.xlu0 %583
          %601 = vrot.lane.b32.xlu0 %v350, 20
          %v602 = vpop.permute.xlu0 %601
          %603 = vrot.lane.b32.xlu0 %v352, 20
          %v604 = vpop.permute.xlu0 %603
          %605 = vrot.lane.b32.xlu0 %v355, 20
          %v606 = vpop.permute.xlu0 %605
          %607 = vrot.lane.b32.xlu0 %v357, 20
          %v608 = vpop.permute.xlu0 %607
          %609 = vrot.lane.b32.xlu0 %v360, 20
          %v610 = vpop.permute.xlu0 %609
          %611 = vrot.lane.b32.xlu0 %v362, 20
          %v612 = vpop.permute.xlu0 %611
          %613 = vrot.lane.b32.xlu0 %v365, 20
          %v614 = vpop.permute.xlu0 %613
          %615 = vrot.lane.b32.xlu0 %v367, 20
          %v616 = vpop.permute.xlu0 %615
          %617 = vrot.lane.b32.xlu0 %v370, 20
          %v618 = vpop.permute.xlu0 %617
          %619 = vrot.lane.b32.xlu0 %v372, 20
          %v620 = vpop.permute.xlu0 %619
          %621 = vrot.lane.b32.xlu0 %v375, 20
          %v622 = vpop.permute.xlu0 %621
          %623 = vrot.lane.b32.xlu0 %v377, 20
          %v624 = vpop.permute.xlu0 %623
          %625 = vrot.lane.b32.xlu0 %v380, 20
          %v626 = vpop.permute.xlu0 %625
          %627 = vrot.lane.b32.xlu0 %v382, 20
          %v628 = vpop.permute.xlu0 %627
          %629 = vrot.lane.b32.xlu0 %v393, 20
          %v630 = vpop.permute.xlu0 %629
          %631 = vrot.lane.b32.xlu0 %v395, 20
          %v632 = vpop.permute.xlu0 %631
          %649 = vrot.lane.b32.xlu0 %v253, 24
          %v650 = vpop.permute.xlu0 %649
          %651 = vrot.lane.b32.xlu0 %v254, 24
          %v652 = vpop.permute.xlu0 %651
          %653 = vrot.lane.b32.xlu0 %v256, 24
          %v654 = vpop.permute.xlu0 %653
          %655 = vrot.lane.b32.xlu0 %v257, 24
          %v656 = vpop.permute.xlu0 %655
          %657 = vrot.lane.b32.xlu0 %v259, 24
          %v658 = vpop.permute.xlu0 %657
          %659 = vrot.lane.b32.xlu0 %v260, 24
          %v660 = vpop.permute.xlu0 %659
          %661 = vrot.lane.b32.xlu0 %v262, 24
          %v662 = vpop.permute.xlu0 %661
          %663 = vrot.lane.b32.xlu0 %v263, 24
          %v664 = vpop.permute.xlu0 %663
          %665 = vrot.lane.b32.xlu0 %v265, 24
          %v666 = vpop.permute.xlu0 %665
          %667 = vrot.lane.b32.xlu0 %v266, 24
          %v668 = vpop.permute.xlu0 %667
          %669 = vrot.lane.b32.xlu0 %v268, 24
          %v670 = vpop.permute.xlu0 %669
          %671 = vrot.lane.b32.xlu0 %v269, 24
          %v672 = vpop.permute.xlu0 %671
          %673 = vrot.lane.b32.xlu0 %v271, 24
          %v674 = vpop.permute.xlu0 %673
          %675 = vrot.lane.b32.xlu0 %v272, 24
          %v676 = vpop.permute.xlu0 %675
          %677 = vrot.lane.b32.xlu0 %v274, 24
          %v678 = vpop.permute.xlu0 %677
          %679 = vrot.lane.b32.xlu0 %v275, 24
          %v680 = vpop.permute.xlu0 %679
          %697 = vrot.lane.b32.xlu0 %v314, 28
          %v698 = vpop.permute.xlu0 %697
          %699 = vrot.lane.b32.xlu0 %v316, 28
          %v700 = vpop.permute.xlu0 %699
          %701 = vrot.lane.b32.xlu0 %v319, 28
          %v702 = vpop.permute.xlu0 %701
          %703 = vrot.lane.b32.xlu0 %v321, 28
          %v704 = vpop.permute.xlu0 %703
          %705 = vrot.lane.b32.xlu0 %v324, 28
          %v706 = vpop.permute.xlu0 %705
          %707 = vrot.lane.b32.xlu0 %v326, 28
          %v708 = vpop.permute.xlu0 %707
          %709 = vrot.lane.b32.xlu0 %v329, 28
          %v710 = vpop.permute.xlu0 %709
          %711 = vrot.lane.b32.xlu0 %v331, 28
          %v712 = vpop.permute.xlu0 %711
          %713 = vrot.lane.b32.xlu0 %v334, 28
          %v714 = vpop.permute.xlu0 %713
          %715 = vrot.lane.b32.xlu0 %v336, 28
          %v716 = vpop.permute.xlu0 %715
          %717 = vrot.lane.b32.xlu0 %v339, 28
          %v718 = vpop.permute.xlu0 %717
          %719 = vrot.lane.b32.xlu0 %v341, 28
          %v720 = vpop.permute.xlu0 %719
          %721 = vrot.lane.b32.xlu0 %v388, 28
          %v722 = vpop.permute.xlu0 %721
          %723 = vrot.lane.b32.xlu0 %v390, 28
          %v724 = vpop.permute.xlu0 %723
          %725 = vrot.lane.b32.xlu0 %v401, 28
          %v726 = vpop.permute.xlu0 %725
          %727 = vrot.lane.b32.xlu0 %v403, 28
          %v728 = vpop.permute.xlu0 %727
          %745 = vrot.lane.b32.xlu0 %v355, 32
          %v746 = vpop.permute.xlu0 %745
          %747 = vrot.lane.b32.xlu0 %v357, 32
          %v748 = vpop.permute.xlu0 %747
          %749 = vrot.lane.b32.xlu0 %v360, 32
          %v750 = vpop.permute.xlu0 %749
          %751 = vrot.lane.b32.xlu0 %v362, 32
          %v752 = vpop.permute.xlu0 %751
          %753 = vrot.lane.b32.xlu0 %v365, 32
          %v754 = vpop.permute.xlu0 %753
          %755 = vrot.lane.b32.xlu0 %v367, 32
          %v756 = vpop.permute.xlu0 %755
          %757 = vrot.lane.b32.xlu0 %v370, 32
          %v758 = vpop.permute.xlu0 %757
          %759 = vrot.lane.b32.xlu0 %v372, 32
          %v760 = vpop.permute.xlu0 %759
          %761 = vrot.lane.b32.xlu0 %v375, 32
          %v762 = vpop.permute.xlu0 %761
          %763 = vrot.lane.b32.xlu0 %v377, 32
          %v764 = vpop.permute.xlu0 %763
          %765 = vrot.lane.b32.xlu0 %v380, 32
          %v766 = vpop.permute.xlu0 %765
          %767 = vrot.lane.b32.xlu0 %v382, 32
          %v768 = vpop.permute.xlu0 %767
          %769 = vrot.lane.b32.xlu0 %v393, 32
          %v770 = vpop.permute.xlu0 %769
          %771 = vrot.lane.b32.xlu0 %v395, 32
          %v772 = vpop.permute.xlu0 %771
          %773 = vrot.lane.b32.xlu0 %v406, 32
          %v774 = vpop.permute.xlu0 %773
          %775 = vrot.lane.b32.xlu0 %v408, 32
          %v776 = vpop.permute.xlu0 %775
          %vm793 = vcmask 31744
          %v794 = vsel %vm793, %v247, %v410
          %v795 = vsel %vm793, %v248, %v412
          %v796 = vsel %vm793, %v250, %v414
          %v797 = vsel %vm793, %v251, %v416
          %v798 = vsel %vm793, %v253, %v418
          %v799 = vsel %vm793, %v254, %v420
          %v800 = vsel %vm793, %v256, %v422
          %v801 = vsel %vm793, %v257, %v424
          %v802 = vsel %vm793, %v259, %v426
          %v803 = vsel %vm793, %v260, %v428
          %v804 = vsel %vm793, %v262, %v430
          %v805 = vsel %vm793, %v263, %v432
          %v806 = vsel %vm793, %v265, %v434
          %v807 = vsel %vm793, %v266, %v436
          %v808 = vsel %vm793, %v268, %v438
          %v809 = vsel %vm793, %v269, %v440
          %vm810 = vcmask 64512
          %v811 = vsel %vm810, %v794, %v458
          %v812 = vsel %vm810, %v795, %v460
          %v813 = vsel %vm810, %v796, %v462
          %v814 = vsel %vm810, %v797, %v464
          %v815 = vsel %vm810, %v798, %v466
          %v816 = vsel %vm810, %v799, %v468
          %v817 = vsel %vm810, %v800, %v470
          %v818 = vsel %vm810, %v801, %v472
          %v819 = vsel %vm810, %v802, %v474
          %v820 = vsel %vm810, %v803, %v476
          %v821 = vsel %vm810, %v804, %v478
          %v822 = vsel %vm810, %v805, %v480
          %v823 = vsel %vm810, %v806, %v482
          %v824 = vsel %vm810, %v807, %v484
          %v825 = vsel %vm810, %v808, %v486
          %v826 = vsel %vm810, %v809, %v488
          %vm827 = vcmask 97280
          %v828 = vsel %vm827, %v811, %v506
          %v829 = vsel %vm827, %v812, %v508
          %v830 = vsel %vm827, %v813, %v510
          %v831 = vsel %vm827, %v814, %v512
          %v832 = vsel %vm827, %v815, %v514
          %v833 = vsel %vm827, %v816, %v516
          %v834 = vsel %vm827, %v817, %v518
          %v835 = vsel %vm827, %v818, %v520
          %v836 = vsel %vm827, %v819, %v522
          %v837 = vsel %vm827, %v820, %v524
          %v838 = vsel %vm827, %v821, %v526
          %v839 = vsel %vm827, %v822, %v528
          %v840 = vsel %vm827, %v823, %v530
          %v841 = vsel %vm827, %v824, %v532
          %v842 = vsel %vm827, %v825, %v534
          %v843 = vsel %vm827, %v826, %v536
          %vm844 = vcmask 130048
          %v845 = vsel %vm844, %v828, %v554
          %v846 = vsel %vm844, %v829, %v556
          %v847 = vsel %vm844, %v830, %v558
          %v848 = vsel %vm844, %v831, %v560
          %v849 = vsel %vm844, %v832, %v562
          %v850 = vsel %vm844, %v833, %v564
          %v851 = vsel %vm844, %v834, %v566
          %v852 = vsel %vm844, %v835, %v568
          %v853 = vsel %vm844, %v836, %v570
          %v854 = vsel %vm844, %v837, %v572
          %v855 = vsel %vm844, %v838, %v574
          %v856 = vsel %vm844, %v839, %v576
          %v857 = vsel %vm844, %v840, %v578
          %v858 = vsel %vm844, %v841, %v580
          %v859 = vsel %vm844, %v842, %v582
          %v860 = vsel %vm844, %v843, %v584
          %vm861 = vcmask 162816
          %v862 = vsel %vm861, %v845, %v602
          %v863 = vsel %vm861, %v846, %v604
          %v864 = vsel %vm861, %v847, %v606
          %v865 = vsel %vm861, %v848, %v608
          %v866 = vsel %vm861, %v849, %v610
          %v867 = vsel %vm861, %v850, %v612
          %v868 = vsel %vm861, %v851, %v614
          %v869 = vsel %vm861, %v852, %v616
          %v870 = vsel %vm861, %v853, %v618
          %v871 = vsel %vm861, %v854, %v620
          %v872 = vsel %vm861, %v855, %v622
          %v873 = vsel %vm861, %v856, %v624
          %v874 = vsel %vm861, %v857, %v626
          %v875 = vsel %vm861, %v858, %v628
          %v876 = vsel %vm861, %v859, %v630
          %v877 = vsel %vm861, %v860, %v632
          %vm878 = vcmask 195584
          %v879 = vsel %vm878, %v862, %v650
          %v880 = vsel %vm878, %v863, %v652
          %v881 = vsel %vm878, %v864, %v654
          %v882 = vsel %vm878, %v865, %v656
          %v883 = vsel %vm878, %v866, %v658
          %v884 = vsel %vm878, %v867, %v660
          %v885 = vsel %vm878, %v868, %v662
          %v886 = vsel %vm878, %v869, %v664
          %v887 = vsel %vm878, %v870, %v666
          %v888 = vsel %vm878, %v871, %v668
          %v889 = vsel %vm878, %v872, %v670
          %v890 = vsel %vm878, %v873, %v672
          %v891 = vsel %vm878, %v874, %v674
          %v892 = vsel %vm878, %v875, %v676
          %v893 = vsel %vm878, %v876, %v678
          %v894 = vsel %vm878, %v877, %v680
          %vm895 = vcmask 228352
          %v896 = vsel %vm895, %v879, %v698
          %v897 = vsel %vm895, %v880, %v700
          %v898 = vsel %vm895, %v881, %v702
          %v899 = vsel %vm895, %v882, %v704
          %v900 = vsel %vm895, %v883, %v706
          %v901 = vsel %vm895, %v884, %v708
          %v902 = vsel %vm895, %v885, %v710
          %v903 = vsel %vm895, %v886, %v712
          %v904 = vsel %vm895, %v887, %v714
          %v905 = vsel %vm895, %v888, %v716
          %v906 = vsel %vm895, %v889, %v718
          %v907 = vsel %vm895, %v890, %v720
          %v908 = vsel %vm895, %v891, %v722
          %v909 = vsel %vm895, %v892, %v724
          %v910 = vsel %vm895, %v893, %v726
          %v911 = vsel %vm895, %v894, %v728
          %vm912 = vcmask 261120
          %v913 = vsel %vm912, %v896, %v746
          %v914 = vsel %vm912, %v897, %v748
          %v915 = vsel %vm912, %v898, %v750
          %v916 = vsel %vm912, %v899, %v752
          %v917 = vsel %vm912, %v900, %v754
          %v918 = vsel %vm912, %v901, %v756
          %v919 = vsel %vm912, %v902, %v758
          %v920 = vsel %vm912, %v903, %v760
          %v921 = vsel %vm912, %v904, %v762
          %v922 = vsel %vm912, %v905, %v764
          %v923 = vsel %vm912, %v906, %v766
          %v924 = vsel %vm912, %v907, %v768
          %v925 = vsel %vm912, %v908, %v770
          %v926 = vsel %vm912, %v909, %v772
          %v927 = vsel %vm912, %v910, %v774
          %v928 = vsel %vm912, %v911, %v776
          %v929 = vpack.c.bf16 %v913, %v913
          %v930 = vpack.c.bf16 %v914, %v914
          %v931 = vpack.c.bf16 %v915, %v915
          %v932 = vpack.c.bf16 %v916, %v916
          %v933 = vpack.c.bf16 %v917, %v917
          %v934 = vpack.c.bf16 %v918, %v918
          %v935 = vpack.c.bf16 %v919, %v919
          %v936 = vpack.c.bf16 %v920, %v920
          %v937 = vpack.c.bf16 %v921, %v921
          %v938 = vpack.c.bf16 %v922, %v922
          %v939 = vpack.c.bf16 %v923, %v923
          %v940 = vpack.c.bf16 %v924, %v924
          %v941 = vpack.c.bf16 %v925, %v925
          %v942 = vpack.c.bf16 %v926, %v926
          %v943 = vpack.c.bf16 %v927, %v927
          %v944 = vpack.c.bf16 %v928, %v928
          %vm945 = vcmask 289792
          %946 = vst.msk [vmem:[#allocation2] sm:$0xf] %vm945, %v929
          %947 = vst.msk [vmem:[#allocation2 + $0x4] sm:$0xf] %vm945, %v930
          %948 = vst.msk [vmem:[#allocation2 + $0x8] sm:$0xf] %vm945, %v931
          %949 = vst.msk [vmem:[#allocation2 + $0xc] sm:$0xf] %vm945, %v932
          %950 = vst.msk [vmem:[#allocation2 + $0x10] sm:$0xf] %vm945, %v933
          %951 = vst.msk [vmem:[#allocation2 + $0x14] sm:$0xf] %vm945, %v934
          %952 = vst.msk [vmem:[#allocation2 + $0x18] sm:$0xf] %vm945, %v935
          %953 = vst.msk [vmem:[#allocation2 + $0x1c] sm:$0xf] %vm945, %v936
          %954 = vst.msk [vmem:[#allocation2 + $0x20] sm:$0xf] %vm945, %v937
          %955 = vst.msk [vmem:[#allocation2 + $0x24] sm:$0xf] %vm945, %v938
          %956 = vst.msk [vmem:[#allocation2 + $0x28] sm:$0xf] %vm945, %v939
          %957 = vst.msk [vmem:[#allocation2 + $0x2c] sm:$0xf] %vm945, %v940
          %958 = vst.msk [vmem:[#allocation2 + $0x30] sm:$0xf] %vm945, %v941
          %959 = vst.msk [vmem:[#allocation2 + $0x34] sm:$0xf] %vm945, %v942
          %960 = vst.msk [vmem:[#allocation2 + $0x38] sm:$0xf] %vm945, %v943
          %961 = vst.msk [vmem:[#allocation2 + $0x3c] sm:$0xf] %vm945, %v944
        $region36: #{tpu_custom_call.1} parent=31 // pred_fallthru
          _
        %v962 = vld [vmem:[#allocation2] sm:$0xf]
        %v963 = vld [vmem:[#allocation2 + $0x4] sm:$0xf]
        %v964 = vld [vmem:[#allocation2 + $0x8] sm:$0xf]
        %v965 = vld [vmem:[#allocation2 + $0xc] sm:$0xf]
        %v966 = vld [vmem:[#allocation2 + $0x10] sm:$0xf]
        %v967 = vld [vmem:[#allocation2 + $0x14] sm:$0xf]
        %v968 = vld [vmem:[#allocation2 + $0x18] sm:$0xf]
        %v969 = vld [vmem:[#allocation2 + $0x1c] sm:$0xf]
        %v970 = vld [vmem:[#allocation2 + $0x20] sm:$0xf]
        %v971 = vld [vmem:[#allocation2 + $0x24] sm:$0xf]
        %v972 = vld [vmem:[#allocation2 + $0x28] sm:$0xf]
        %v973 = vld [vmem:[#allocation2 + $0x2c] sm:$0xf]
        %v974 = vld [vmem:[#allocation2 + $0x30] sm:$0xf]
        %v975 = vld [vmem:[#allocation2 + $0x34] sm:$0xf]
        %v976 = vld [vmem:[#allocation2 + $0x38] sm:$0xf]
        %v977 = vld [vmem:[#allocation2 + $0x3c] sm:$0xf]
        %v978 = vld [vmem:[%s235] sm:$0xf]
        %v979 = vld [vmem:[%s235 + $0x4] sm:$0xf]
        %v980 = vld [vmem:[%s235 + $0x8] sm:$0xf]
        %v981 = vld [vmem:[%s235 + $0xc] sm:$0xf]
        %v982 = vld [vmem:[%s235 + $0x10] sm:$0x3]
        %v983 = vld [vmem:[%s238] sm:$0x1]
        %v985 = vperm.slane %v983, 0
        %v1003 = vunpack.c.l.b16 %v962
        %v1004 = vunpack.c.l.b16 %v963
        %v1005 = vunpack.c.l.b16 %v964
        %v1006 = vunpack.c.l.b16 %v965
        %v1007 = vunpack.c.l.b16 %v966
        %v1008 = vunpack.c.l.b16 %v967
        %v1009 = vunpack.c.l.b16 %v968
        %v1010 = vunpack.c.l.b16 %v969
        %v1011 = vunpack.c.l.b16 %v970
        %v1012 = vunpack.c.l.b16 %v971
        %v1013 = vunpack.c.l.b16 %v972
        %v1014 = vunpack.c.l.b16 %v973
        %v1015 = vunpack.c.l.b16 %v974
        %v1016 = vunpack.c.l.b16 %v975
        %v1017 = vunpack.c.l.b16 %v976
        %v1018 = vunpack.c.l.b16 %v977
        %v1019 = vpack.c.b16 %v1004, %v1003
        %v1020 = vpack.c.b16 %v1006, %v1005
        %v1021 = vpack.c.b16 %v1008, %v1007
        %v1022 = vpack.c.b16 %v1010, %v1009
        %v1023 = vpack.c.b16 %v1012, %v1011
        %v1024 = vpack.c.b16 %v1014, %v1013
        %v1025 = vpack.c.b16 %v1016, %v1015
        %v1026 = vpack.c.b16 %v1018, %v1017
        %v1032 = vunpack.c.l.b16 %v978
        %v1033 = vunpack.c.l.b16 %v979
        %v1034 = vunpack.c.l.b16 %v980
        %v1035 = vunpack.c.l.b16 %v981
        %v1036 = vunpack.c.l.b16 %v982
        %v1037 = vpack.c.b16 %v1033, %v1032
        %v1038 = vpack.c.b16 %v1035, %v1034
        %v1039 = vpack.c.b16 %v1036, %v1036
        %vm1042 = vcmask 293888
        %v1044 = vsel %vm1042, %v1019, 0
        %v1047 = vsel %vm1042, %v1020, 0
        %v1050 = vsel %vm1042, %v1021, 0
        %v1053 = vsel %vm1042, %v1022, 0
        %v1056 = vsel %vm1042, %v1023, 0
        %v1059 = vsel %vm1042, %v1024, 0
        %v1062 = vsel %vm1042, %v1025, 0
        %v1065 = vsel %vm1042, %v1026, 0
        %vm1067 = vcmask 1041408
        %v1069 = vsel %vm1067, %v1039, 0
        %1071 = vmatpush.bf16.msra.mxu0 0
        %1072 = vmatpush.bf16.msra.mxu0 0
        %1073 = vmatpush.bf16.msra.mxu0 0
        %1074 = vmatpush.bf16.msra.mxu0 0
        %1075 = vmatpush.bf16.msra.mxu0 0
        %1076 = vmatpush.bf16.msra.mxu0 %v1069
        %1077 = vmatpush.bf16.msra.mxu0 %v1038
        %1078 = vmatpush.bf16.msra.mxu0 %v1037
        %1079 = vmatmul.bf16.gmra.mxu0 %v1044
        %v1080 = vpop.f32.mrf.mxu0
        %v1081 = vadd.f32 %v985, %v1080
        %v1082 = vpop.f32.mrf.mxu0
        %v1083 = vadd.f32 %v985, %v1082
        %1084 = vmatmul.bf16.gmra.mxu0 %v1047
        %v1085 = vpop.f32.mrf.mxu0
        %v1086 = vadd.f32 %v985, %v1085
        %v1087 = vpop.f32.mrf.mxu0
        %v1088 = vadd.f32 %v985, %v1087
        %1089 = vmatmul.bf16.gmra.mxu0 %v1050
        %v1090 = vpop.f32.mrf.mxu0
        %v1091 = vadd.f32 %v985, %v1090
        %v1092 = vpop.f32.mrf.mxu0
        %v1093 = vadd.f32 %v985, %v1092
        %1094 = vmatmul.bf16.gmra.mxu0 %v1053
        %v1095 = vpop.f32.mrf.mxu0
        %v1096 = vadd.f32 %v985, %v1095
        %v1097 = vpop.f32.mrf.mxu0
        %v1098 = vadd.f32 %v985, %v1097
        %1099 = vmatmul.bf16.gmra.mxu0 %v1056
        %v1100 = vpop.f32.mrf.mxu0
        %v1101 = vadd.f32 %v985, %v1100
        %v1102 = vpop.f32.mrf.mxu0
        %v1103 = vadd.f32 %v985, %v1102
        %1104 = vmatmul.bf16.gmra.mxu0 %v1059
        %v1105 = vpop.f32.mrf.mxu0
        %v1106 = vadd.f32 %v985, %v1105
        %v1107 = vpop.f32.mrf.mxu0
        %v1108 = vadd.f32 %v985, %v1107
        %1109 = vmatmul.bf16.gmra.mxu0 %v1062
        %v1110 = vpop.f32.mrf.mxu0
        %v1111 = vadd.f32 %v985, %v1110
        %v1112 = vpop.f32.mrf.mxu0
        %v1113 = vadd.f32 %v985, %v1112
        %1114 = vmatmul.bf16.gmra.mxu0 %v1065
        %v1115 = vpop.f32.mrf.mxu0
        %v1116 = vadd.f32 %v985, %v1115
        %v1117 = vpop.f32.mrf.mxu0
        %v1118 = vadd.f32 %v985, %v1117
        %1119 = vdwg.mxu0
        %v1120 = vxor.u32 %v1081, 2147483648
        %v1121 = vxor.u32 %v1083, 2147483648
        %v1122 = vxor.u32 %v1086, 2147483648
        %v1123 = vxor.u32 %v1088, 2147483648
        %v1124 = vxor.u32 %v1091, 2147483648
        %v1125 = vxor.u32 %v1093, 2147483648
        %v1126 = vxor.u32 %v1096, 2147483648
        %v1127 = vxor.u32 %v1098, 2147483648
        %v1128 = vxor.u32 %v1101, 2147483648
        %v1129 = vxor.u32 %v1103, 2147483648
        %v1130 = vxor.u32 %v1106, 2147483648
        %v1131 = vxor.u32 %v1108, 2147483648
        %v1132 = vxor.u32 %v1111, 2147483648
        %v1133 = vxor.u32 %v1113, 2147483648
        %v1134 = vxor.u32 %v1116, 2147483648
        %v1135 = vxor.u32 %v1118, 2147483648
        %v1136 = vmul.f32 %v1120, 1.442695
        %v1137 = vpow.pop %v1136
        %v1138 = vmul.f32 %v1121, 1.442695
        %v1139 = vpow.pop %v1138
        %v1140 = vmul.f32 %v1122, 1.442695
        %v1141 = vpow.pop %v1140
        %v1142 = vmul.f32 %v1123, 1.442695
        %v1143 = vpow.pop %v1142
        %v1144 = vmul.f32 %v1124, 1.442695
        %v1145 = vpow.pop %v1144
        %v1146 = vmul.f32 %v1125, 1.442695
        %v1147 = vpow.pop %v1146
        %v1148 = vmul.f32 %v1126, 1.442695
        %v1149 = vpow.pop %v1148
        %v1150 = vmul.f32 %v1127, 1.442695
        %v1151 = vpow.pop %v1150
        %v1152 = vmul.f32 %v1128, 1.442695
        %v1153 = vpow.pop %v1152
        %v1154 = vmul.f32 %v1129, 1.442695
        %v1155 = vpow.pop %v1154
        %v1156 = vmul.f32 %v1130, 1.442695
        %v1157 = vpow.pop %v1156
        %v1158 = vmul.f32 %v1131, 1.442695
        %v1159 = vpow.pop %v1158
        %v1160 = vmul.f32 %v1132, 1.442695
        %v1161 = vpow.pop %v1160
        %v1162 = vmul.f32 %v1133, 1.442695
        %v1163 = vpow.pop %v1162
        %v1164 = vmul.f32 %v1134, 1.442695
        %v1165 = vpow.pop %v1164
        %v1166 = vmul.f32 %v1135, 1.442695
        %v1167 = vpow.pop %v1166
        %v1168 = vadd.f32 %v1137, 1.0
        %v1169 = vadd.f32 %v1139, 1.0
        %v1170 = vadd.f32 %v1141, 1.0
        %v1171 = vadd.f32 %v1143, 1.0
        %v1172 = vadd.f32 %v1145, 1.0
        %v1173 = vadd.f32 %v1147, 1.0
        %v1174 = vadd.f32 %v1149, 1.0
        %v1175 = vadd.f32 %v1151, 1.0
        %v1176 = vadd.f32 %v1153, 1.0
        %v1177 = vadd.f32 %v1155, 1.0
        %v1178 = vadd.f32 %v1157, 1.0
        %v1179 = vadd.f32 %v1159, 1.0
        %v1180 = vadd.f32 %v1161, 1.0
        %v1181 = vadd.f32 %v1163, 1.0
        %v1182 = vadd.f32 %v1165, 1.0
        %v1183 = vadd.f32 %v1167, 1.0
        %v1184 = vrcp.pop %v1168
        %v1185 = vmul.f32 %v1168, %v1184
        %v1186 = vsub.f32 1.0, %v1185
        %v1187 = vmul.f32 %v1184, %v1186
        %v1188 = vadd.f32 %v1184, %v1187
        %vm1189 = vweird.f32 %v1168
        %vm1190 = vweird.f32 %v1184
        %vm1191 = vmor %vm1189, %vm1190
        %v1192 = vsel %vm1191, %v1184, %v1188
        %v1193 = vand.u32 2147483647, %v1168
        %vm1194 = vcmp.eq.f32.partialorder %v1193, 8.507059e+37
        %v1195 = vand.u32 %v1168, 2147483648
        %v1196 = vor.u32 1.1754944e-38, %v1195
        %v1197 = vsel %vm1194, %v1196, %v1192
        %v1198 = vmul.f32 1.0, %v1197
        %v1199 = vrcp.pop %v1169
        %v1200 = vmul.f32 %v1169, %v1199
        %v1201 = vsub.f32 1.0, %v1200
        %v1202 = vmul.f32 %v1199, %v1201
        %v1203 = vadd.f32 %v1199, %v1202
        %vm1204 = vweird.f32 %v1169
        %vm1205 = vweird.f32 %v1199
        %vm1206 = vmor %vm1204, %vm1205
        %v1207 = vsel %vm1206, %v1199, %v1203
        %v1208 = vand.u32 2147483647, %v1169
        %vm1209 = vcmp.eq.f32.partialorder %v1208, 8.507059e+37
        %v1210 = vand.u32 %v1169, 2147483648
        %v1211 = vor.u32 1.1754944e-38, %v1210
        %v1212 = vsel %vm1209, %v1211, %v1207
        %v1213 = vmul.f32 1.0, %v1212
        %v1214 = vrcp.pop %v1170
        %v1215 = vmul.f32 %v1170, %v1214
        %v1216 = vsub.f32 1.0, %v1215
        %v1217 = vmul.f32 %v1214, %v1216
        %v1218 = vadd.f32 %v1214, %v1217
        %vm1219 = vweird.f32 %v1170
        %vm1220 = vweird.f32 %v1214
        %vm1221 = vmor %vm1219, %vm1220
        %v1222 = vsel %vm1221, %v1214, %v1218
        %v1223 = vand.u32 2147483647, %v1170
        %vm1224 = vcmp.eq.f32.partialorder %v1223, 8.507059e+37
        %v1225 = vand.u32 %v1170, 2147483648
        %v1226 = vor.u32 1.1754944e-38, %v1225
        %v1227 = vsel %vm1224, %v1226, %v1222
        %v1228 = vmul.f32 1.0, %v1227
        %v1229 = vrcp.pop %v1171
        %v1230 = vmul.f32 %v1171, %v1229
        %v1231 = vsub.f32 1.0, %v1230
        %v1232 = vmul.f32 %v1229, %v1231
        %v1233 = vadd.f32 %v1229, %v1232
        %vm1234 = vweird.f32 %v1171
        %vm1235 = vweird.f32 %v1229
        %vm1236 = vmor %vm1234, %vm1235
        %v1237 = vsel %vm1236, %v1229, %v1233
        %v1238 = vand.u32 2147483647, %v1171
        %vm1239 = vcmp.eq.f32.partialorder %v1238, 8.507059e+37
        %v1240 = vand.u32 %v1171, 2147483648
        %v1241 = vor.u32 1.1754944e-38, %v1240
        %v1242 = vsel %vm1239, %v1241, %v1237
        %v1243 = vmul.f32 1.0, %v1242
        %v1244 = vrcp.pop %v1172
        %v1245 = vmul.f32 %v1172, %v1244
        %v1246 = vsub.f32 1.0, %v1245
        %v1247 = vmul.f32 %v1244, %v1246
        %v1248 = vadd.f32 %v1244, %v1247
        %vm1249 = vweird.f32 %v1172
        %vm1250 = vweird.f32 %v1244
        %vm1251 = vmor %vm1249, %vm1250
        %v1252 = vsel %vm1251, %v1244, %v1248
        %v1253 = vand.u32 2147483647, %v1172
        %vm1254 = vcmp.eq.f32.partialorder %v1253, 8.507059e+37
        %v1255 = vand.u32 %v1172, 2147483648
        %v1256 = vor.u32 1.1754944e-38, %v1255
        %v1257 = vsel %vm1254, %v1256, %v1252
        %v1258 = vmul.f32 1.0, %v1257
        %v1259 = vrcp.pop %v1173
        %v1260 = vmul.f32 %v1173, %v1259
        %v1261 = vsub.f32 1.0, %v1260
        %v1262 = vmul.f32 %v1259, %v1261
        %v1263 = vadd.f32 %v1259, %v1262
        %vm1264 = vweird.f32 %v1173
        %vm1265 = vweird.f32 %v1259
        %vm1266 = vmor %vm1264, %vm1265
        %v1267 = vsel %vm1266, %v1259, %v1263
        %v1268 = vand.u32 2147483647, %v1173
        %vm1269 = vcmp.eq.f32.partialorder %v1268, 8.507059e+37
        %v1270 = vand.u32 %v1173, 2147483648
        %v1271 = vor.u32 1.1754944e-38, %v1270
        %v1272 = vsel %vm1269, %v1271, %v1267
        %v1273 = vmul.f32 1.0, %v1272
        %v1274 = vrcp.pop %v1174
        %v1275 = vmul.f32 %v1174, %v1274
        %v1276 = vsub.f32 1.0, %v1275
        %v1277 = vmul.f32 %v1274, %v1276
        %v1278 = vadd.f32 %v1274, %v1277
        %vm1279 = vweird.f32 %v1174
        %vm1280 = vweird.f32 %v1274
        %vm1281 = vmor %vm1279, %vm1280
        %v1282 = vsel %vm1281, %v1274, %v1278
        %v1283 = vand.u32 2147483647, %v1174
        %vm1284 = vcmp.eq.f32.partialorder %v1283, 8.507059e+37
        %v1285 = vand.u32 %v1174, 2147483648
        %v1286 = vor.u32 1.1754944e-38, %v1285
        %v1287 = vsel %vm1284, %v1286, %v1282
        %v1288 = vmul.f32 1.0, %v1287
        %v1289 = vrcp.pop %v1175
        %v1290 = vmul.f32 %v1175, %v1289
        %v1291 = vsub.f32 1.0, %v1290
        %v1292 = vmul.f32 %v1289, %v1291
        %v1293 = vadd.f32 %v1289, %v1292
        %vm1294 = vweird.f32 %v1175
        %vm1295 = vweird.f32 %v1289
        %vm1296 = vmor %vm1294, %vm1295
        %v1297 = vsel %vm1296, %v1289, %v1293
        %v1298 = vand.u32 2147483647, %v1175
        %vm1299 = vcmp.eq.f32.partialorder %v1298, 8.507059e+37
        %v1300 = vand.u32 %v1175, 2147483648
        %v1301 = vor.u32 1.1754944e-38, %v1300
        %v1302 = vsel %vm1299, %v1301, %v1297
        %v1303 = vmul.f32 1.0, %v1302
        %v1304 = vrcp.pop %v1176
        %v1305 = vmul.f32 %v1176, %v1304
        %v1306 = vsub.f32 1.0, %v1305
        %v1307 = vmul.f32 %v1304, %v1306
        %v1308 = vadd.f32 %v1304, %v1307
        %vm1309 = vweird.f32 %v1176
        %vm1310 = vweird.f32 %v1304
        %vm1311 = vmor %vm1309, %vm1310
        %v1312 = vsel %vm1311, %v1304, %v1308
        %v1313 = vand.u32 2147483647, %v1176
        %vm1314 = vcmp.eq.f32.partialorder %v1313, 8.507059e+37
        %v1315 = vand.u32 %v1176, 2147483648
        %v1316 = vor.u32 1.1754944e-38, %v1315
        %v1317 = vsel %vm1314, %v1316, %v1312
        %v1318 = vmul.f32 1.0, %v1317
        %v1319 = vrcp.pop %v1177
        %v1320 = vmul.f32 %v1177, %v1319
        %v1321 = vsub.f32 1.0, %v1320
        %v1322 = vmul.f32 %v1319, %v1321
        %v1323 = vadd.f32 %v1319, %v1322
        %vm1324 = vweird.f32 %v1177
        %vm1325 = vweird.f32 %v1319
        %vm1326 = vmor %vm1324, %vm1325
        %v1327 = vsel %vm1326, %v1319, %v1323
        %v1328 = vand.u32 2147483647, %v1177
        %vm1329 = vcmp.eq.f32.partialorder %v1328, 8.507059e+37
        %v1330 = vand.u32 %v1177, 2147483648
        %v1331 = vor.u32 1.1754944e-38, %v1330
        %v1332 = vsel %vm1329, %v1331, %v1327
        %v1333 = vmul.f32 1.0, %v1332
        %v1334 = vrcp.pop %v1178
        %v1335 = vmul.f32 %v1178, %v1334
        %v1336 = vsub.f32 1.0, %v1335
        %v1337 = vmul.f32 %v1334, %v1336
        %v1338 = vadd.f32 %v1334, %v1337
        %vm1339 = vweird.f32 %v1178
        %vm1340 = vweird.f32 %v1334
        %vm1341 = vmor %vm1339, %vm1340
        %v1342 = vsel %vm1341, %v1334, %v1338
        %v1343 = vand.u32 2147483647, %v1178
        %vm1344 = vcmp.eq.f32.partialorder %v1343, 8.507059e+37
        %v1345 = vand.u32 %v1178, 2147483648
        %v1346 = vor.u32 1.1754944e-38, %v1345
        %v1347 = vsel %vm1344, %v1346, %v1342
        %v1348 = vmul.f32 1.0, %v1347
        %v1349 = vrcp.pop %v1179
        %v1350 = vmul.f32 %v1179, %v1349
        %v1351 = vsub.f32 1.0, %v1350
        %v1352 = vmul.f32 %v1349, %v1351
        %v1353 = vadd.f32 %v1349, %v1352
        %vm1354 = vweird.f32 %v1179
        %vm1355 = vweird.f32 %v1349
        %vm1356 = vmor %vm1354, %vm1355
        %v1357 = vsel %vm1356, %v1349, %v1353
        %v1358 = vand.u32 2147483647, %v1179
        %vm1359 = vcmp.eq.f32.partialorder %v1358, 8.507059e+37
        %v1360 = vand.u32 %v1179, 2147483648
        %v1361 = vor.u32 1.1754944e-38, %v1360
        %v1362 = vsel %vm1359, %v1361, %v1357
        %v1363 = vmul.f32 1.0, %v1362
        %v1364 = vrcp.pop %v1180
        %v1365 = vmul.f32 %v1180, %v1364
        %v1366 = vsub.f32 1.0, %v1365
        %v1367 = vmul.f32 %v1364, %v1366
        %v1368 = vadd.f32 %v1364, %v1367
        %vm1369 = vweird.f32 %v1180
        %vm1370 = vweird.f32 %v1364
        %vm1371 = vmor %vm1369, %vm1370
        %v1372 = vsel %vm1371, %v1364, %v1368
        %v1373 = vand.u32 2147483647, %v1180
        %vm1374 = vcmp.eq.f32.partialorder %v1373, 8.507059e+37
        %v1375 = vand.u32 %v1180, 2147483648
        %v1376 = vor.u32 1.1754944e-38, %v1375
        %v1377 = vsel %vm1374, %v1376, %v1372
        %v1378 = vmul.f32 1.0, %v1377
        %v1379 = vrcp.pop %v1181
        %v1380 = vmul.f32 %v1181, %v1379
        %v1381 = vsub.f32 1.0, %v1380
        %v1382 = vmul.f32 %v1379, %v1381
        %v1383 = vadd.f32 %v1379, %v1382
        %vm1384 = vweird.f32 %v1181
        %vm1385 = vweird.f32 %v1379
        %vm1386 = vmor %vm1384, %vm1385
        %v1387 = vsel %vm1386, %v1379, %v1383
        %v1388 = vand.u32 2147483647, %v1181
        %vm1389 = vcmp.eq.f32.partialorder %v1388, 8.507059e+37
        %v1390 = vand.u32 %v1181, 2147483648
        %v1391 = vor.u32 1.1754944e-38, %v1390
        %v1392 = vsel %vm1389, %v1391, %v1387
        %v1393 = vmul.f32 1.0, %v1392
        %v1394 = vrcp.pop %v1182
        %v1395 = vmul.f32 %v1182, %v1394
        %v1396 = vsub.f32 1.0, %v1395
        %v1397 = vmul.f32 %v1394, %v1396
        %v1398 = vadd.f32 %v1394, %v1397
        %vm1399 = vweird.f32 %v1182
        %vm1400 = vweird.f32 %v1394
        %vm1401 = vmor %vm1399, %vm1400
        %v1402 = vsel %vm1401, %v1394, %v1398
        %v1403 = vand.u32 2147483647, %v1182
        %vm1404 = vcmp.eq.f32.partialorder %v1403, 8.507059e+37
        %v1405 = vand.u32 %v1182, 2147483648
        %v1406 = vor.u32 1.1754944e-38, %v1405
        %v1407 = vsel %vm1404, %v1406, %v1402
        %v1408 = vmul.f32 1.0, %v1407
        %v1409 = vrcp.pop %v1183
        %v1410 = vmul.f32 %v1183, %v1409
        %v1411 = vsub.f32 1.0, %v1410
        %v1412 = vmul.f32 %v1409, %v1411
        %v1413 = vadd.f32 %v1409, %v1412
        %vm1414 = vweird.f32 %v1183
        %vm1415 = vweird.f32 %v1409
        %vm1416 = vmor %vm1414, %vm1415
        %v1417 = vsel %vm1416, %v1409, %v1413
        %v1418 = vand.u32 2147483647, %v1183
        %vm1419 = vcmp.eq.f32.partialorder %v1418, 8.507059e+37
        %v1420 = vand.u32 %v1183, 2147483648
        %v1421 = vor.u32 1.1754944e-38, %v1420
        %v1422 = vsel %vm1419, %v1421, %v1417
        %v1423 = vmul.f32 1.0, %v1422
        %v1424 = vmul.f32 %v1081, %v1198
        %v1425 = vmul.f32 %v1083, %v1213
        %v1426 = vmul.f32 %v1086, %v1228
        %v1427 = vmul.f32 %v1088, %v1243
        %v1428 = vmul.f32 %v1091, %v1258
        %v1429 = vmul.f32 %v1093, %v1273
        %v1430 = vmul.f32 %v1096, %v1288
        %v1431 = vmul.f32 %v1098, %v1303
        %v1432 = vmul.f32 %v1101, %v1318
        %v1433 = vmul.f32 %v1103, %v1333
        %v1434 = vmul.f32 %v1106, %v1348
        %v1435 = vmul.f32 %v1108, %v1363
        %v1436 = vmul.f32 %v1111, %v1378
        %v1437 = vmul.f32 %v1113, %v1393
        %v1438 = vmul.f32 %v1116, %v1408
        %v1439 = vmul.f32 %v1118, %v1423
        %1440 = vst [vmem:[%s222] sm:$0xff] %v1424
        %1441 = vst [vmem:[%s222 + $0x8] sm:$0xff] %v1425
        %1442 = vst [vmem:[%s222 + $0x10] sm:$0xff] %v1426
        %1443 = vst [vmem:[%s222 + $0x18] sm:$0xff] %v1427
        %1444 = vst [vmem:[%s222 + $0x20] sm:$0xff] %v1428
        %1445 = vst [vmem:[%s222 + $0x28] sm:$0xff] %v1429
        %1446 = vst [vmem:[%s222 + $0x30] sm:$0xff] %v1430
        %1447 = vst [vmem:[%s222 + $0x38] sm:$0xff] %v1431
        %1448 = vst [vmem:[%s222 + $0x40] sm:$0xff] %v1432
        %1449 = vst [vmem:[%s222 + $0x48] sm:$0xff] %v1433
        %1450 = vst [vmem:[%s222 + $0x50] sm:$0xff] %v1434
        %1451 = vst [vmem:[%s222 + $0x58] sm:$0xff] %v1435
        %1452 = vst [vmem:[%s222 + $0x60] sm:$0xff] %v1436
        %1453 = vst [vmem:[%s222 + $0x68] sm:$0xff] %v1437
        %1454 = vst [vmem:[%s222 + $0x70] sm:$0xff] %v1438
        %1455 = vst [vmem:[%s222 + $0x78] sm:$0xff] %v1439
        %s1456 = sand.u32 %s130, 1
        %s1457 = scalar_lea.sflag [#allocation4], %s1456
        %s1458 = sand.u32 %s130, 1
        %s1459 = smul.addr %s1458, 128
        %s1460 = scalar_lea.vmem [#allocation3], %s1459
        // Predicated region
        $region37: #{tpu_custom_call.1} parent=31 // pred_check
          %p1461 = pneg %p140
        $region38: #{tpu_custom_call.1} parent=31 // pred_check_branch
          %1463 = sbr.rel (%p1461) target = $region40
        $region39: #{tpu_custom_call.1} parent=31 // pred_region
          %s1464 = smul.u32 %s22, 2
          %s1465 = sadd.s32 %s1464, %s23
          %s1466 = smul.u32 16, %s1465
          %1468 = vsyncadd %s1457, 0
          %s1469 = sadd.s32 %s24, %s1466
          %s1470 = smul.addr %s1469, 8
          %s1471 = scalar_lea.hbm %s3, %s1470
          %s1472 = sshll.u32 %s1460, 4
          %s1473 = int_to_ptr.vmem [resolvable:$true] %s1472
          %s1474 = sshll.u32 %s1471, 4
          %s1475 = int_to_ptr.hbm [resolvable:$true] %s1474
          %1480 = dma.vmem_to_hbm [thread:$0]  %s1473, 2048, %s1475, %s1457, 128, 128, 8
        $region40: #{tpu_custom_call.1} parent=31 // pred_fallthru
          _
      $region32: #{tpu_custom_call.1} parent=5 // pred_fallthru
        _
      %p1481 = scmp.le.s32.totalorder 2, %s12
      // Predicated region
      $region41: #{tpu_custom_call.1} parent=5 // pred_check
        %p1482 = pneg %p1481
      $region42: #{tpu_custom_call.1} parent=5 // pred_check_branch
        %1484 = sbr.rel (%p1482) target = $region44
      $region43: #{tpu_custom_call.1} parent=5 // pred_region
        %s1485 = ssub.s32 %s12, 2
        // Predicated region
        $region45: #{tpu_custom_call.1} parent=43 // pred_check
          %p1486 = pneg %p146
        $region46: #{tpu_custom_call.1} parent=43 // pred_check_branch
          %1488 = sbr.rel (%p1486) target = $region48
        $region47: #{tpu_custom_call.1} parent=43 // pred_region
          %s1489 = sand.u32 %s131, 1
          %s1490 = scalar_lea.sflag [#allocation4], %s1489
          %s1491 = sand.u32 %s131, 1
          %s1492 = smul.addr %s1491, 128
          %s1493 = scalar_lea.vmem [#allocation3], %s1492
          %1495 = dma.done %s1490, 2048
        $region48: #{tpu_custom_call.1} parent=43 // pred_fallthru
          _
      $region44: #{tpu_custom_call.1} parent=5 // pred_fallthru
        _
    $region6: #{tpu_custom_call.1} parent=1 // loop_footer
      %s16 = sadd.s32 1, %s12
    $region7: #{tpu_custom_call.1} parent=1 // loop_footer_branch
      %11 = sbr.rel target = $region3
    $region8: #{tpu_custom_call.1} parent=1 // loop_exit
      _
    %1496 = vsyncpa [#allocation4], 1
    %s1497 = scalar_lea.sflag [#allocation4], 1
    %1498 = vsyncpa %s1497, 1

</llo_original>
